<compile_context>
chip_gen: v7x
topology: tpu7x:2x2x1
jax: 0.10.0
libtpu: 0.0.40
codegen_flags: <defaults>
</compile_context>

<pallas_src>
import jax
import jax.numpy as jnp
import numpy as np
from jax.experimental import pallas as pl
from jax.experimental.pallas import tpu as pltpu

_LANE = 128


def _round_up(x, m):
    return (x + m - 1) // m * m


def _pad_to(x, shape):
    pads = [(0, t - s) for s, t in zip(x.shape, shape)]
    if all(p == (0, 0) for p in pads):
        return x
    return jnp.pad(x, pads)


def _vmem_capacity_bytes():
    """Physical per-core VMEM (128 MiB v5e/v6e, 64 MiB v7x); safe fallback."""
    try:
        cap = getattr(pltpu.get_tpu_info(), "vmem_capacity_bytes", None)
        if cap:
            return int(cap)
    except Exception:
        pass
    return 64 * 1024 * 1024  # conservative: v7x per-core VMEM


def _gcn_kernel_full(x_full_ref, a_ref, w1_ref, w2_ref, b_ref, o_ref):
    """Fp >= Dp path: agg = (A @ x) @ W2, x resident per batch tile.

    x_full_ref: (Bt, Np, Dp)  features, all nodes (op dtype: f32 or bf16)
    a_ref     : (Bt, TM, Np)  adjacency row tile (op dtype)
    w1_ref    : (Dp, Fp)      op dtype (multiplies x rows)
    w2_ref    : (Dp, Fp)      f32     (multiplies the f32 aggregate)
    b_ref     : (1, Fp)       f32
    o_ref     : (Bt, TM, Fp)
    """
    Bt, TM, Fp = o_ref.shape
    _, Np, Dp = x_full_ref.shape

    # Self-branch rows sliced from the resident full-feature block (no second
    # HBM read of the features).
    row = pl.multiple_of(pl.program_id(1) * TM, TM)
    x_row = x_full_ref[:, pl.ds(row, TM), :].reshape(Bt * TM, Dp)

    x_full = x_full_ref[...]                       # (Bt, Np, Dp)
    adj = a_ref[...]                               # (Bt, TM, Np)

    # Self branch: x @ W1 (MXU, f32 accumulate).
    out2 = jnp.dot(x_row, w1_ref[...], preferred_element_type=jnp.float32)

    # Aggregation branch: (A @ x) @ W2, f32 accumulate throughout.
    agg = jnp.einsum('bmn,bnd->bmd', adj, x_full,
                     preferred_element_type=jnp.float32)
    agg2 = jnp.dot(agg.reshape(Bt * TM, Dp), w2_ref[...],
                   preferred_element_type=jnp.float32)

    out2 = out2 + agg2 + b_ref[...]                # (1, Fp) broadcasts
    o_ref[...] = jnp.maximum(out2, 0.0).reshape(Bt, TM, Fp).astype(o_ref.dtype)


def _gcn_kernel_preproj(x_row_ref, z_full_ref, a_ref, w1_ref, b_ref, o_ref):
    """Fp < Dp path: z = x @ W2 precomputed in the wrapper; agg = A @ z.

    x_row_ref : (Bt, TM, Dp)  feature row tile (self branch only)
    z_full_ref: (Bt, Np, Fp)  pre-projected aggregation operand, resident
    a_ref     : (Bt, TM, Np)  adjacency row tile
    w1_ref    : (Dp, Fp), b_ref: (1, Fp) f32, o_ref: (Bt, TM, Fp)
    """
    Bt, TM, Fp = o_ref.shape
    Dp = x_row_ref.shape[-1]

    x_row = x_row_ref[...].reshape(Bt * TM, Dp)
    out2 = jnp.dot(x_row, w1_ref[...], preferred_element_type=jnp.float32)

    agg2 = jnp.einsum('bmn,bnf->bmf', a_ref[...], z_full_ref[...],
                      preferred_element_type=jnp.float32
                      ).reshape(Bt * TM, Fp)

    out2 = out2 + agg2 + b_ref[...]
    o_ref[...] = jnp.maximum(out2, 0.0).reshape(Bt, TM, Fp).astype(o_ref.dtype)


def graph_conv(features, A, weight, bias, *, agg_in_bf16=False,
               batch_tile=None, node_tile=None):
    """features: (B, N, D), A: (B, N, N) row-normalized adjacency,
       weight: (2D, F), bias: (F,)  ->  (B, N, F) float32-like output."""
    B, N, D = features.shape
    two_d, F = weight.shape
    assert two_d == 2 * D
    assert A.shape == (B, N, N)

    # Lane-dense padding (last dims to multiples of 128); sliced off at end.
    Dp = _round_up(D, _LANE)
    Fp = _round_up(F, _LANE)
    Np = _round_up(N, _LANE)

    op_dtype = jnp.bfloat16 if agg_in_bf16 else jnp.float32
    item = 2 if agg_in_bf16 else 4

    feat32 = features.astype(jnp.float32)
    A_p = _pad_to(A.astype(op_dtype), (B, Np, Np))
    w1_p = _pad_to(weight[:D].astype(op_dtype), (Dp, Fp))
    w2_f32 = _pad_to(weight[D:].astype(jnp.float32), (Dp, Fp))
    b_p = _pad_to(bias.astype(jnp.float32).reshape(1, F), (1, Fp))
    feat_p = _pad_to(feat32.astype(op_dtype), (B, Np, Dp))

    pre_project = Fp < Dp
    if pre_project:
        # One full-precision XLA matmul outside the kernel; the in-kernel
        # O(N^2) aggregation then has inner width Fp (< Dp) and is NOT
        # recomputed per node tile.
        z = jnp.einsum('bnd,df->bnf', feat32, weight[D:].astype(jnp.float32))
        z_p = _pad_to(z.astype(op_dtype), (B, Np, Fp))

    # ---- tiling ----------------------------------------------------------
    if batch_tile is None:
        # Keep the batch axis as a parallel grid axis (feeds both v7x
        # TensorCores when B >= 2); per-step overhead (~0.35 us) is noise.
        batch_tile = 1
    Bt = batch_tile
    assert B % Bt == 0

    cap_bytes = _vmem_capacity_bytes()
    budget = (cap_bytes * 7) // 10          # tile-derivation budget
    vmem_limit = (cap_bytes * 17) // 20     # headroom for internal scratch

    if node_tile is None:
        # Conservative accounting: every BlockSpec block is double-buffered
        # by the default pipeline, plus the f32 intermediates live in VMEM.
        if pre_project:
            fixed = (2 * Bt * Np * Fp * item     # z (resident, 2 buffers)
                     + 2 * Dp * Fp * item        # W1
                     + 2 * Fp * 4)               # bias
            per_row = (2 * Bt * (Np * item + Dp * item + Fp * 4)  # A, x, out
                       + Bt * 3 * Fp * 4)                          # f32 temps
        else:
            fixed = (2 * Bt * Np * Dp * item     # x_full (resident, 2 bufs)
                     + 2 * Dp * Fp * item        # W1
                     + 2 * Dp * Fp * 4           # W2 (f32)
                     + 2 * Fp * 4)               # bias
            per_row = (2 * Bt * (Np * item + Fp * 4)               # A, out
                       + Bt * (Dp * 4 + Dp * item + 2 * Fp * 4))   # agg, x_row
        cap_rows = max(_LANE, (budget - fixed) // per_row) \
            if budget > fixed else _LANE
        # Largest multiple-of-128 divisor of Np that fits the budget; this
        # naturally picks >=256-row tiles (full 2x256^2 MXU occupancy on
        # v6e/v7x) whenever they fit.
        node_tile = _LANE
        cand = _LANE
        while cand <= min(Np, cap_rows):
            if Np % cand == 0:
                node_tile = cand
            cand += _LANE
    TM = node_tile
    assert Np % TM == 0 and TM % _LANE == 0

    grid = (B // Bt, Np // TM)

    if pre_project:
        kernel = _gcn_kernel_preproj
        in_specs = [
            pl.BlockSpec((Bt, TM, Dp), lambda bi, j: (bi, j, 0)),   # x row tile
            pl.BlockSpec((Bt, Np, Fp), lambda bi, j: (bi, 0, 0)),   # z resident
            pl.BlockSpec((Bt, TM, Np), lambda bi, j: (bi, j, 0)),   # A row tile
            pl.BlockSpec((Dp, Fp), lambda bi, j: (0, 0)),           # W1
            pl.BlockSpec((1, Fp), lambda bi, j: (0, 0)),            # bias
        ]
        operands = (feat_p, z_p, A_p, w1_p, b_p)
    else:
        kernel = _gcn_kernel_full
        in_specs = [
            pl.BlockSpec((Bt, Np, Dp), lambda bi, j: (bi, 0, 0)),   # x resident
            pl.BlockSpec((Bt, TM, Np), lambda bi, j: (bi, j, 0)),   # A row tile
            pl.BlockSpec((Dp, Fp), lambda bi, j: (0, 0)),           # W1
            pl.BlockSpec((Dp, Fp), lambda bi, j: (0, 0)),           # W2 (f32)
            pl.BlockSpec((1, Fp), lambda bi, j: (0, 0)),            # bias
        ]
        operands = (feat_p, A_p, w1_p, w2_f32, b_p)

    out_p = pl.pallas_call(
        kernel,
        out_shape=jax.ShapeDtypeStruct((B, Np, Fp), features.dtype),
        grid_spec=pltpu.PrefetchScalarGridSpec(
            num_scalar_prefetch=0,
            grid=grid,
            in_specs=in_specs,
            out_specs=pl.BlockSpec((Bt, TM, Fp), lambda bi, j: (bi, j, 0)),
        ),
        compiler_params=pltpu.CompilerParams(
            dimension_semantics=("parallel", "parallel"),
            vmem_limit_bytes=vmem_limit),
    )(*operands)

    return out_p[:, :N, :F]


def _xavier_uniform(key, shape, dtype=jnp.float32):
    fan_in, fan_out = shape
    bound = float(np.sqrt(6.0 / (fan_in + fan_out)))
    return jax.random.uniform(key, shape, dtype, minval=-bound, maxval=bound)


def _reference(features, A, weight, bias):
    agg = jnp.einsum("bij,bjd->bid", A, features)
    cat = jnp.concatenate([features, agg], axis=2)
    return jax.nn.relu(jnp.einsum("bnd,df->bnf", cat, weight) + bias)


if __name__ == "__main__":
    key = jax.random.PRNGKey(0)

    # ---- Test 1: D == F (Fp >= Dp path), exact f32 and bf16 operands. ----
    B, N, D, F = 2, 16, 32, 32
    k1, k2, k3, key = jax.random.split(key, 4)
    features = jax.random.normal(k1, (B, N, D), dtype=jnp.float32)
    adj_raw = jax.random.uniform(k2, (B, N, N), dtype=jnp.float32)
    A = adj_raw / jnp.sum(adj_raw, axis=-1, keepdims=True)   # mean aggregator
    weight = _xavier_uniform(k3, (2 * D, F))
    bias = jnp.zeros((F,), dtype=jnp.float32)
    ref = np.asarray(_reference(features, A, weight, bias))

    out = jax.block_until_ready(graph_conv(features, A, weight, bias))
    np.testing.assert_allclose(np.asarray(out), ref, rtol=1e-5, atol=1e-5)

    # bf16 operands (features, A, W1) with f32 accumulation; looser tolerance.
    out_bf16 = jax.block_until_ready(
        graph_conv(features, A, weight, bias, agg_in_bf16=True))
    np.testing.assert_allclose(np.asarray(out_bf16), ref, rtol=5e-2, atol=5e-2)

    # ---- Test 2: F < D -> pre-projected aggregation operand path, f32. ----
    B2, N2, D2, F2 = 2, 16, 160, 32
    k4, k5, k6, key = jax.random.split(key, 4)
    features2 = jax.random.normal(k4, (B2, N2, D2), dtype=jnp.float32)
    adj_raw2 = jax.random.uniform(k5, (B2, N2, N2), dtype=jnp.float32)
    A2 = adj_raw2 / jnp.sum(adj_raw2, axis=-1, keepdims=True)
    weight2 = _xavier_uniform(k6, (2 * D2, F2))
    bias2 = jnp.zeros((F2,), dtype=jnp.float32)
    ref2 = np.asarray(_reference(features2, A2, weight2, bias2))

    out2 = jax.block_until_ready(graph_conv(features2, A2, weight2, bias2))
    # Reassociated as A @ (x @ W2): mathematically equal, tiny f32 rounding diff.
    np.testing.assert_allclose(np.asarray(out2), ref2, rtol=1e-4, atol=1e-4)

    print("KERNEL_OK")
</pallas_src>

<mosaic_0001>
module attributes {stable_mosaic.version = 11 : i64} {
  func.func @_gcn_kernel_full(%arg0: i32, %arg1: i32, %arg2: memref<1x128x128xf32, #tpu.memory_space<vmem>>, %arg3: memref<1x128x128xf32, #tpu.memory_space<vmem>>, %arg4: memref<128x128xf32, #tpu.memory_space<vmem>>, %arg5: memref<128x128xf32, #tpu.memory_space<vmem>>, %arg6: memref<1x128xf32, #tpu.memory_space<vmem>>, %arg7: memref<1x128x128xf32, #tpu.memory_space<vmem>>) attributes {dimension_semantics = [#tpu.dimension_semantics<parallel>, #tpu.dimension_semantics<parallel>], iteration_bounds = array<i64: 2, 1>, scalar_prefetch = 0 : i64, scratch_operands = 0 : i64, tpu.core_type = #tpu.core_type<tc>, window_params = [{transform_indices = @transform_0, window_bounds = array<i64: 1, 128, 128>}, {transform_indices = @transform_1, window_bounds = array<i64: 1, 128, 128>}, {pipeline_mode = #tpu.pipeline_mode<synchronous>, transform_indices = @transform_2, window_bounds = array<i64: 128, 128>}, {pipeline_mode = #tpu.pipeline_mode<synchronous>, transform_indices = @transform_3, window_bounds = array<i64: 128, 128>}, {pipeline_mode = #tpu.pipeline_mode<synchronous>, transform_indices = @transform_4, window_bounds = array<i64: 1, 128>}, {transform_indices = @transform_5, window_bounds = array<i64: 1, 128, 128>}]} {
    %c128_i32 = arith.constant 128 : i32
    %0 = arith.muli %arg1, %c128_i32 : i32
    %1 = tpu.assume_multiple %0, 128 : i32
    %c0 = arith.constant 0 : index
    %2 = arith.index_cast %1 : i32 to index
    %c0_0 = arith.constant 0 : index
    %3 = vector.load %arg2[%c0, %2, %c0_0] : memref<1x128x128xf32, #tpu.memory_space<vmem>>, vector<1x128x128xf32>
    %4 = vector.shape_cast %3 : vector<1x128x128xf32> to vector<128x128xf32>
    %c0_1 = arith.constant 0 : index
    %c0_2 = arith.constant 0 : index
    %c0_3 = arith.constant 0 : index
    %5 = vector.load %arg2[%c0_1, %c0_2, %c0_3] : memref<1x128x128xf32, #tpu.memory_space<vmem>>, vector<1x128x128xf32>
    %c0_4 = arith.constant 0 : index
    %c0_5 = arith.constant 0 : index
    %c0_6 = arith.constant 0 : index
    %6 = vector.load %arg3[%c0_4, %c0_5, %c0_6] : memref<1x128x128xf32, #tpu.memory_space<vmem>>, vector<1x128x128xf32>
    %c0_7 = arith.constant 0 : index
    %c0_8 = arith.constant 0 : index
    %7 = vector.load %arg4[%c0_7, %c0_8] : memref<128x128xf32, #tpu.memory_space<vmem>>, vector<128x128xf32>
    %cst = arith.constant dense<0.000000e+00> : vector<128x128xf32>
    %8 = tpu.matmul %4, %7, %cst {dimension_numbers = #tpu.dot_dimension_numbers<[1], [0], [0], [1], [0, 0, 1, 1], [], []>} : vector<128x128xf32>, vector<128x128xf32>, vector<128x128xf32> -> vector<128x128xf32>
    "tpu.trace_start"() <{level = 10 : i32, message = "bmn,bnd->bmd"}> : () -> ()
    %cst_9 = arith.constant dense<0.000000e+00> : vector<1x128x128xf32>
    %9 = tpu.matmul %6, %5, %cst_9 {dimension_numbers = #tpu.dot_dimension_numbers<[2], [1], [1], [2], [0, 0, 0, 1, 1, 2], [0], [0]>} : vector<1x128x128xf32>, vector<1x128x128xf32>, vector<1x128x128xf32> -> vector<1x128x128xf32>
    "tpu.trace_stop"() : () -> ()
    %10 = vector.shape_cast %9 : vector<1x128x128xf32> to vector<128x128xf32>
    %c0_10 = arith.constant 0 : index
    %c0_11 = arith.constant 0 : index
    %11 = vector.load %arg5[%c0_10, %c0_11] : memref<128x128xf32, #tpu.memory_space<vmem>>, vector<128x128xf32>
    %cst_12 = arith.constant dense<0.000000e+00> : vector<128x128xf32>
    %12 = tpu.matmul %10, %11, %cst_12 {dimension_numbers = #tpu.dot_dimension_numbers<[1], [0], [0], [1], [0, 0, 1, 1], [], []>} : vector<128x128xf32>, vector<128x128xf32>, vector<128x128xf32> -> vector<128x128xf32>
    %13 = arith.addf %8, %12 : vector<128x128xf32>
    %c0_13 = arith.constant 0 : index
    %c0_14 = arith.constant 0 : index
    %14 = vector.load %arg6[%c0_13, %c0_14] : memref<1x128xf32, #tpu.memory_space<vmem>>, vector<1x128xf32>
    %15 = vector.broadcast %14 : vector<1x128xf32> to vector<128x128xf32>
    %16 = arith.addf %13, %15 : vector<128x128xf32>
    %cst_15 = arith.constant 0.000000e+00 : f32
    %17 = vector.broadcast %cst_15 : f32 to vector<128x128xf32>
    %18 = arith.maximumf %16, %17 : vector<128x128xf32>
    %19 = vector.shape_cast %18 : vector<128x128xf32> to vector<1x128x128xf32>
    %c0_16 = arith.constant 0 : index
    %c0_17 = arith.constant 0 : index
    %c0_18 = arith.constant 0 : index
    %20 = vector.load %arg7[%c0_16, %c0_17, %c0_18] : memref<1x128x128xf32, #tpu.memory_space<vmem>>, vector<1x128x128xf32>
    tpu.vector_store %arg7[%c0_16, %c0_17, %c0_18], %19 {strides = array<i32>} : memref<1x128x128xf32, #tpu.memory_space<vmem>>, vector<1x128x128xf32>,
    return
  }
  func.func @transform_0(%arg0: i32, %arg1: i32) -> (i32, i32, i32) {
    %c0_i32 = arith.constant 0 : i32
    %c0_i32_0 = arith.constant 0 : i32
    %c0_i32_1 = arith.constant 0 : i32
    return %arg0, %c0_i32, %c0_i32_0 : i32, i32, i32
  }
  func.func @transform_1(%arg0: i32, %arg1: i32) -> (i32, i32, i32) {
    %c0_i32 = arith.constant 0 : i32
    %c0_i32_0 = arith.constant 0 : i32
    return %arg0, %arg1, %c0_i32 : i32, i32, i32
  }
  func.func @transform_2(%arg0: i32, %arg1: i32) -> (i32, i32) {
    %c0_i32 = arith.constant 0 : i32
    %c0_i32_0 = arith.constant 0 : i32
    %c0_i32_1 = arith.constant 0 : i32
    return %c0_i32, %c0_i32_0 : i32, i32
  }
  func.func @transform_3(%arg0: i32, %arg1: i32) -> (i32, i32) {
    %c0_i32 = arith.constant 0 : i32
    %c0_i32_0 = arith.constant 0 : i32
    %c0_i32_1 = arith.constant 0 : i32
    return %c0_i32, %c0_i32_0 : i32, i32
  }
  func.func @transform_4(%arg0: i32, %arg1: i32) -> (i32, i32) {
    %c0_i32 = arith.constant 0 : i32
    %c0_i32_0 = arith.constant 0 : i32
    %c0_i32_1 = arith.constant 0 : i32
    return %c0_i32, %c0_i32_0 : i32, i32
  }
  func.func @transform_5(%arg0: i32, %arg1: i32) -> (i32, i32, i32) {
    %c0_i32 = arith.constant 0 : i32
    %c0_i32_0 = arith.constant 0 : i32
    return %arg0, %arg1, %c0_i32 : i32, i32, i32
  }
}

</mosaic_0001>

<llo_original>
// kernel: tpu_custom_call.1
$region0: #{tpu_custom_call.1}
  #allocation0 [shape = 'u32[]', space=smem, size = 0x4, offset = 0x4, fixed_abs, tag = 'smem constant byte address 0x4 - core index']
  #allocation1 [shape = 'u32[144,128]{1,0:T(1,128)}', space=vmem, size = 0x12000, scoped, tag = 'internal scratch']
  %s0 = inlined_call_operand.hbm [shape: f32[2,128,128], index: 0, kind: input, shape index: {}]
  %s1 = inlined_call_operand.hbm [shape: f32[2,128,128], index: 1, kind: input, shape index: {}]
  %s2 = inlined_call_operand.hbm [shape: f32[128,128], index: 2, kind: input, shape index: {}]
  %s3 = inlined_call_operand.hbm [shape: f32[128,128], index: 3, kind: input, shape index: {}]
  %s4 = inlined_call_operand.vmem [shape: f32[1,128], index: 4, kind: input, shape index: {}]
  %s5 = inlined_call_operand.hbm [shape: f32[2,128,128], index: 5, kind: output, shape index: {}]
  %s6 = sld [smem:[#allocation0]]
  $region69: #{tpu_custom_call.1} parent=0
    _
  %s8 = ssub.s32 1, %s6
  %s9 = scalar_select 0, %s8, %s6
  $region1: #{tpu_custom_call.1} parent=0
    #allocation2 [shape = 'u8[131072]{0}', space=vmem, size = 0x20000, scoped, tag = 'input window, operand 0']
    #allocation3 [shape = 's32[2]{0}', space=sflag, size = 0x8, scoped, tag = 'scoped memory for tpu_custom_call.1']
    #allocation4 [shape = 's32[2]{0}', space=sflag, size = 0x8, scoped, tag = 'scoped memory for tpu_custom_call.1']
    #allocation5 [shape = 'u8[131072]{0}', space=vmem, size = 0x20000, scoped, tag = 'input window, operand 1']
    #allocation6 [shape = 's32[2]{0}', space=sflag, size = 0x8, scoped, tag = 'scoped memory for tpu_custom_call.1']
    #allocation7 [shape = 'u8[65536]{0}', space=vmem, size = 0x10000, scoped, tag = 'input window, operand 2, single buffered']
    #allocation8 [shape = 'u8[65536]{0}', space=vmem, size = 0x10000, scoped, tag = 'input window, operand 3, single buffered']
    #allocation9 [shape = 's32[1]{0}', space=sflag, size = 0x4, scoped, tag = 'scoped memory for tpu_custom_call.1']
    #allocation10 [shape = 'u8[131072]{0}', space=vmem, size = 0x20000, scoped, tag = 'output window, operand 0']
    %10 = vsyncpa [#allocation3], 0
    %s11 = scalar_lea.sflag [#allocation3], 1
    %12 = vsyncpa %s11, 0
    %13 = vsyncpa [#allocation6], 0
    %s14 = scalar_lea.sflag [#allocation6], 1
    %15 = vsyncpa %s14, 0
    %16 = vsyncpa [#allocation9], 0
    %17 = vsyncpa [#allocation4], 0
    %s18 = scalar_lea.sflag [#allocation4], 1
    %19 = vsyncpa %s18, 0
    loop: start=0, step=1, limit=4
    $region2: #{tpu_custom_call.1} parent=1 // loop_pre_header
      _
    $region3: #{tpu_custom_call.1} parent=1 // loop_header
      %s21 = sphi 0, %s25
      %p22 = scmp.ge.s32.totalorder %s21, 4
      %s28 = sphi 0, %s40
      %s29 = sphi 0, %s36
      %s30 = sphi 0, %s28
      %s31 = sphi 0, %s29
      %s32 = sphi 0, %s30
      %s33 = sphi 0, %s31
      %s43 = sphi 0, %s45
      %s46 = sphi 0, %s43
      %s47 = sphi 0, %s46
      %s63 = sphi 0, %s47
      %s71 = sphi 0, %s73
      %s74 = sphi 0, %s71
      %s75 = sphi 0, %s74
      %s91 = sphi 0, %s75
      %s95 = sphi 0, %s95
      %s97 = sphi 0, %s95
      %s98 = sphi 0, %s97
      %s112 = sphi 0, %s98
      %s116 = sphi 0, %s116
      %s118 = sphi 0, %s116
      %s119 = sphi 0, %s118
      %s133 = sphi 0, %s119
      %s137 = sphi 0, %s137
      %s139 = sphi 0, %s137
      %s140 = sphi 0, %s139
      %s154 = sphi 0, %s140
      %s162 = sphi 0, %s164
      %s165 = sphi 0, %s162
      %s166 = sphi 0, %s165
      %s182 = sphi 0, %s166
    $region4: #{tpu_custom_call.1} parent=1 // loop_header_branch
      %24 = sbr.rel (%p22) target = $region8
    $region5: #{tpu_custom_call.1} parent=1 // loop_body
      %s26 = ssub.s32 %s21, 1
      %s27 = ssub.s32 %s21, 2
      %s34 = sadd.s32 1, %s29
      %p35 = scmp.ge.s32.totalorder %s34, 1
      %s36 = scalar_select %p35, 0, %s34
      %s37 = sadd.s32 1, %s28
      %s38 = scalar_select %p35, %s37, %s28
      %p39 = scmp.ge.s32.totalorder %s38, 2
      %s40 = scalar_select %p39, 0, %s38
      %s41 = ssub.s32 %s28, %s40
      %p42 = scmp.eq.s32.totalorder %s41, 0
      %s44 = sadd.s32 %s43, 1
      %s45 = scalar_select %p42, %s43, %s44
      %p48 = pneg %p42
      %p49 = scmp.eq.s32.totalorder %s21, 1
      %p50 = por %p48, %p49
      %p51 = scmp.ne.s32.totalorder %s43, %s46
      %p52 = scmp.eq.s32.totalorder %s21, 0
      %p53 = por %p51, %p52
      %p54 = scmp.ne.s32.totalorder %s43, %s46
      %p55 = scmp.eq.s32.totalorder %s26, 1
      %p56 = por %p54, %p55
      %p57 = scmp.ne.s32.totalorder %s46, %s47
      %p58 = scmp.eq.s32.totalorder %s26, 0
      %p59 = por %p57, %p58
      %p60 = scmp.ne.s32.totalorder %s46, %s47
      %p61 = scmp.eq.s32.totalorder %s27, 1
      %p62 = por %p60, %p61
      %p64 = scmp.ne.s32.totalorder %s47, %s63
      %p65 = scmp.eq.s32.totalorder %s27, 0
      %p66 = por %p64, %p65
      %s67 = ssub.s32 %s28, %s40
      %s68 = ssub.s32 %s29, %s36
      %s69 = sor.u32 %s67, %s68
      %p70 = scmp.eq.s32.totalorder %s69, 0
      %s72 = sadd.s32 %s71, 1
      %s73 = scalar_select %p70, %s71, %s72
      %p76 = pneg %p70
      %p77 = scmp.eq.s32.totalorder %s21, 1
      %p78 = por %p76, %p77
      %p79 = scmp.ne.s32.totalorder %s71, %s74
      %p80 = scmp.eq.s32.totalorder %s21, 0
      %p81 = por %p79, %p80
      %p82 = scmp.ne.s32.totalorder %s71, %s74
      %p83 = scmp.eq.s32.totalorder %s26, 1
      %p84 = por %p82, %p83
      %p85 = scmp.ne.s32.totalorder %s74, %s75
      %p86 = scmp.eq.s32.totalorder %s26, 0
      %p87 = por %p85, %p86
      %p88 = scmp.ne.s32.totalorder %s74, %s75
      %p89 = scmp.eq.s32.totalorder %s27, 1
      %p90 = por %p88, %p89
      %p92 = scmp.ne.s32.totalorder %s75, %s91
      %p93 = scmp.eq.s32.totalorder %s27, 0
      %p94 = por %p92, %p93
      %s96 = sadd.s32 %s95, 1
      %p99 = scmp.eq.s32.totalorder %s21, 1
      %p100 = scmp.ne.s32.totalorder %s95, %s97
      %p101 = scmp.eq.s32.totalorder %s21, 0
      %p102 = por %p100, %p101
      %p103 = scmp.ne.s32.totalorder %s95, %s97
      %p104 = scmp.eq.s32.totalorder %s26, 1
      %p105 = por %p103, %p104
      %p106 = scmp.ne.s32.totalorder %s97, %s98
      %p107 = scmp.eq.s32.totalorder %s26, 0
      %p108 = por %p106, %p107
      %p109 = scmp.ne.s32.totalorder %s97, %s98
      %p110 = scmp.eq.s32.totalorder %s27, 1
      %p111 = por %p109, %p110
      %p113 = scmp.ne.s32.totalorder %s98, %s112
      %p114 = scmp.eq.s32.totalorder %s27, 0
      %p115 = por %p113, %p114
      %s117 = sadd.s32 %s116, 1
      %p120 = scmp.eq.s32.totalorder %s21, 1
      %p121 = scmp.ne.s32.totalorder %s116, %s118
      %p122 = scmp.eq.s32.totalorder %s21, 0
      %p123 = por %p121, %p122
      %p124 = scmp.ne.s32.totalorder %s116, %s118
      %p125 = scmp.eq.s32.totalorder %s26, 1
      %p126 = por %p124, %p125
      %p127 = scmp.ne.s32.totalorder %s118, %s119
      %p128 = scmp.eq.s32.totalorder %s26, 0
      %p129 = por %p127, %p128
      %p130 = scmp.ne.s32.totalorder %s118, %s119
      %p131 = scmp.eq.s32.totalorder %s27, 1
      %p132 = por %p130, %p131
      %p134 = scmp.ne.s32.totalorder %s119, %s133
      %p135 = scmp.eq.s32.totalorder %s27, 0
      %p136 = por %p134, %p135
      %s138 = sadd.s32 %s137, 1
      %p141 = scmp.eq.s32.totalorder %s21, 1
      %p142 = scmp.ne.s32.totalorder %s137, %s139
      %p143 = scmp.eq.s32.totalorder %s21, 0
      %p144 = por %p142, %p143
      %p145 = scmp.ne.s32.totalorder %s137, %s139
      %p146 = scmp.eq.s32.totalorder %s26, 1
      %p147 = por %p145, %p146
      %p148 = scmp.ne.s32.totalorder %s139, %s140
      %p149 = scmp.eq.s32.totalorder %s26, 0
      %p150 = por %p148, %p149
      %p151 = scmp.ne.s32.totalorder %s139, %s140
      %p152 = scmp.eq.s32.totalorder %s27, 1
      %p153 = por %p151, %p152
      %p155 = scmp.ne.s32.totalorder %s140, %s154
      %p156 = scmp.eq.s32.totalorder %s27, 0
      %p157 = por %p155, %p156
      %s158 = ssub.s32 %s28, %s40
      %s159 = ssub.s32 %s29, %s36
      %s160 = sor.u32 %s158, %s159
      %p161 = scmp.eq.s32.totalorder %s160, 0
      %s163 = sadd.s32 %s162, 1
      %s164 = scalar_select %p161, %s162, %s163
      %p167 = pneg %p161
      %p168 = scmp.eq.s32.totalorder %s21, 1
      %p169 = por %p167, %p168
      %p170 = scmp.ne.s32.totalorder %s162, %s165
      %p171 = scmp.eq.s32.totalorder %s21, 0
      %p172 = por %p170, %p171
      %p173 = scmp.ne.s32.totalorder %s162, %s165
      %p174 = scmp.eq.s32.totalorder %s26, 1
      %p175 = por %p173, %p174
      %p176 = scmp.ne.s32.totalorder %s165, %s166
      %p177 = scmp.eq.s32.totalorder %s26, 0
      %p178 = por %p176, %p177
      %p179 = scmp.ne.s32.totalorder %s165, %s166
      %p180 = scmp.eq.s32.totalorder %s27, 1
      %p181 = por %p179, %p180
      %p183 = scmp.ne.s32.totalorder %s166, %s182
      %p184 = scmp.eq.s32.totalorder %s27, 0
      %p185 = por %p183, %p184
      %p186 = scmp.le.s32.totalorder 1, %s21
      %p187 = scmp.lt.s32.totalorder %s21, 3
      %p188 = pnand %p186, %p187
      %p189 = pneg %p188
      // Predicated region
      $region9: #{tpu_custom_call.1} parent=5 // pred_check
        _
      $region10: #{tpu_custom_call.1} parent=5 // pred_check_branch
        %191 = sbr.rel (%p188) target = $region12
      $region11: #{tpu_custom_call.1} parent=5 // pred_region
        %s192 = ssub.s32 %s21, 1
        // Predicated region
        $region13: #{tpu_custom_call.1} parent=11 // pred_check
          %p193 = pneg %p108
        $region14: #{tpu_custom_call.1} parent=11 // pred_check_branch
          %195 = sbr.rel (%p193) target = $region16
        $region15: #{tpu_custom_call.1} parent=11 // pred_region
          %s197 = ssub.s32 2048, 2048
          %198 = vsyncadd [#allocation6], %s197
          %s199 = sshll.u32 [#allocation7], 4
          %s200 = int_to_ptr.vmem [resolvable:$true] %s199
          %205 = dma.hbm_to_vmem [thread:$0]  %s2, 2048, %s200, [#allocation6], 128, 128, 8
        $region16: #{tpu_custom_call.1} parent=11 // pred_fallthru
          _
        // Predicated region
        $region17: #{tpu_custom_call.1} parent=11 // pred_check
          %p206 = pneg %p129
        $region18: #{tpu_custom_call.1} parent=11 // pred_check_branch
          %208 = sbr.rel (%p206) target = $region20
        $region19: #{tpu_custom_call.1} parent=11 // pred_region
          %s210 = ssub.s32 2048, 2048
          %211 = vsyncadd [#allocation9], %s210
          %s212 = sshll.u32 [#allocation8], 4
          %s213 = int_to_ptr.vmem [resolvable:$true] %s212
          %218 = dma.hbm_to_vmem [thread:$0]  %s3, 2048, %s213, [#allocation9], 128, 128, 8
        $region20: #{tpu_custom_call.1} parent=11 // pred_fallthru
          _
        // Predicated region
        $region21: #{tpu_custom_call.1} parent=11 // pred_check
          %p219 = pneg %p150
        $region22: #{tpu_custom_call.1} parent=11 // pred_check_branch
          %221 = sbr.rel (%p219) target = $region24
        $region23: #{tpu_custom_call.1} parent=11 // pred_region
          _
        $region24: #{tpu_custom_call.1} parent=11 // pred_fallthru
          _
      $region12: #{tpu_custom_call.1} parent=5 // pred_fallthru
        _
      %p222 = scmp.lt.s32.totalorder %s21, 2
      // Predicated region
      $region25: #{tpu_custom_call.1} parent=5 // pred_check
        %p223 = pneg %p222
      $region26: #{tpu_custom_call.1} parent=5 // pred_check_branch
        %225 = sbr.rel (%p223) target = $region28
      $region27: #{tpu_custom_call.1} parent=5 // pred_region
        // Predicated region
        $region29: #{tpu_custom_call.1} parent=27 // pred_check
          %p226 = pneg %p53
        $region30: #{tpu_custom_call.1} parent=27 // pred_check_branch
          %228 = sbr.rel (%p226) target = $region32
        $region31: #{tpu_custom_call.1} parent=27 // pred_region
          %s229 = sand.u32 %s43, 1
          %s230 = scalar_lea.sflag [#allocation3], %s229
          %s231 = sand.u32 %s43, 1
          %s232 = smul.addr %s231, 128
          %s233 = scalar_lea.vmem [#allocation2], %s232
          %s235 = ssub.s32 2048, 2048
          %236 = vsyncadd %s230, %s235
          %s237 = smul.addr %s28, 16
          %s238 = smul.addr %s237, 128
          %s239 = scalar_lea.hbm %s0, %s238
          %s240 = sshll.u32 %s233, 4
          %s241 = int_to_ptr.vmem [resolvable:$true] %s240
          %246 = dma.hbm_to_vmem [thread:$0]  %s239, 2048, %s241, %s230, 128, 128, 8
        $region32: #{tpu_custom_call.1} parent=27 // pred_fallthru
          _
        // Predicated region
        $region33: #{tpu_custom_call.1} parent=27 // pred_check
          %p247 = pneg %p81
        $region34: #{tpu_custom_call.1} parent=27 // pred_check_branch
          %249 = sbr.rel (%p247) target = $region36
        $region35: #{tpu_custom_call.1} parent=27 // pred_region
          %s250 = sand.u32 %s21, 1
          %s251 = scalar_lea.sflag [#allocation6], %s250
          %s252 = sand.u32 %s71, 1
          %s253 = smul.addr %s252, 128
          %s254 = scalar_lea.vmem [#allocation5], %s253
          %s255 = smul.u32 16, %s29
          %s257 = ssub.s32 2048, 2048
          %258 = vsyncadd %s251, %s257
          %s259 = smul.addr %s28, 16
          %s260 = sadd.s32 %s255, %s259
          %s261 = smul.addr %s260, 128
          %s262 = scalar_lea.hbm %s1, %s261
          %s263 = sshll.u32 %s254, 4
          %s264 = int_to_ptr.vmem [resolvable:$true] %s263
          %269 = dma.hbm_to_vmem [thread:$0]  %s262, 2048, %s264, %s251, 128, 128, 8
        $region36: #{tpu_custom_call.1} parent=27 // pred_fallthru
          _
      $region28: #{tpu_custom_call.1} parent=5 // pred_fallthru
        _
      %p270 = scmp.le.s32.totalorder 1, %s21
      %p271 = scmp.lt.s32.totalorder %s21, 3
      %p272 = pnand %p270, %p271
      %p273 = pneg %p272
      // Predicated region
      $region37: #{tpu_custom_call.1} parent=5 // pred_check
        _
      $region38: #{tpu_custom_call.1} parent=5 // pred_check_branch
        %275 = sbr.rel (%p272) target = $region40
      $region39: #{tpu_custom_call.1} parent=5 // pred_region
        %s276 = ssub.s32 %s21, 1
        %s277 = sand.u32 %s46, 1
        %s278 = scalar_lea.sflag [#allocation3], %s277
        %s279 = sand.u32 %s46, 1
        %s280 = smul.addr %s279, 128
        %s281 = scalar_lea.vmem [#allocation2], %s280
        // Predicated region
        $region41: #{tpu_custom_call.1} parent=39 // pred_check
          %p282 = pneg %p59
        $region42: #{tpu_custom_call.1} parent=39 // pred_check_branch
          %284 = sbr.rel (%p282) target = $region44
        $region43: #{tpu_custom_call.1} parent=39 // pred_region
          %285 = dma.done %s278, 2048
        $region44: #{tpu_custom_call.1} parent=39 // pred_fallthru
          _
        %s286 = sand.u32 %s26, 1
        %s287 = scalar_lea.sflag [#allocation6], %s286
        %s288 = sand.u32 %s74, 1
        %s289 = smul.addr %s288, 128
        %s290 = scalar_lea.vmem [#allocation5], %s289
        // Predicated region
        $region45: #{tpu_custom_call.1} parent=39 // pred_check
          %p291 = pneg %p87
        $region46: #{tpu_custom_call.1} parent=39 // pred_check_branch
          %293 = sbr.rel (%p291) target = $region48
        $region47: #{tpu_custom_call.1} parent=39 // pred_region
          %294 = dma.done %s287, 2048
        $region48: #{tpu_custom_call.1} parent=39 // pred_fallthru
          _
        // Predicated region
        $region49: #{tpu_custom_call.1} parent=39 // pred_check
          %p295 = pneg %p108
        $region50: #{tpu_custom_call.1} parent=39 // pred_check_branch
          %297 = sbr.rel (%p295) target = $region52
        $region51: #{tpu_custom_call.1} parent=39 // pred_region
          %298 = dma.done [#allocation6], 2048
        $region52: #{tpu_custom_call.1} parent=39 // pred_fallthru
          _
        // Predicated region
        $region53: #{tpu_custom_call.1} parent=39 // pred_check
          %p299 = pneg %p129
        $region54: #{tpu_custom_call.1} parent=39 // pred_check_branch
          %301 = sbr.rel (%p299) target = $region56
        $region55: #{tpu_custom_call.1} parent=39 // pred_region
          %302 = dma.done [#allocation9], 2048
        $region56: #{tpu_custom_call.1} parent=39 // pred_fallthru
          _
        %s303 = sand.u32 %s46, 1
        %s304 = scalar_lea.sflag [#allocation3], %s303
        %s305 = sand.u32 %s46, 1
        %s306 = smul.addr %s305, 128
        %s307 = scalar_lea.vmem [#allocation2], %s306
        %p308 = pneg %p59
        %p309 = pneg %p56
        %s310 = sand.u32 %s26, 1
        %s311 = scalar_lea.sflag [#allocation6], %s310
        %s312 = sand.u32 %s74, 1
        %s313 = smul.addr %s312, 128
        %s314 = scalar_lea.vmem [#allocation5], %s313
        %p315 = pneg %p87
        %p316 = pneg %p84
        %p317 = pneg %p108
        %p318 = pneg %p105
        %p319 = pneg %p129
        %p320 = pneg %p126
        %p321 = pneg %p150
        %p322 = pneg %p147
        %p323 = pneg %p178
        %p324 = pneg %p175
        %s325 = sand.u32 %s165, 1
        %s326 = scalar_lea.sflag [#allocation4], %s325
        %s327 = sand.u32 %s165, 1
        %s328 = smul.addr %s327, 128
        %s329 = scalar_lea.vmem [#allocation10], %s328
        %s330 = smul.u32 16, %s31
        %s331 = smul.u32 16, %s31
        %s332 = smul.u32 %s31, 128
        %s333 = scalar_lea.vmem %s281, %s332 [#allocation2]
        %v334 = vld [vmem:[%s333] sm:$0xff]
        %v335 = vld [vmem:[%s333 + $0x8] sm:$0xff]
        %v336 = vld [vmem:[%s333 + $0x10] sm:$0xff]
        %v337 = vld [vmem:[%s333 + $0x18] sm:$0xff]
        %v338 = vld [vmem:[%s333 + $0x20] sm:$0xff]
        %v339 = vld [vmem:[%s333 + $0x28] sm:$0xff]
        %v340 = vld [vmem:[%s333 + $0x30] sm:$0xff]
        %v341 = vld [vmem:[%s333 + $0x38] sm:$0xff]
        %v342 = vld [vmem:[%s333 + $0x40] sm:$0xff]
        %v343 = vld [vmem:[%s333 + $0x48] sm:$0xff]
        %v344 = vld [vmem:[%s333 + $0x50] sm:$0xff]
        %v345 = vld [vmem:[%s333 + $0x58] sm:$0xff]
        %v346 = vld [vmem:[%s333 + $0x60] sm:$0xff]
        %v347 = vld [vmem:[%s333 + $0x68] sm:$0xff]
        %v348 = vld [vmem:[%s333 + $0x70] sm:$0xff]
        %v349 = vld [vmem:[%s333 + $0x78] sm:$0xff]
        %v350 = vld [vmem:[%s281] sm:$0xff]
        %v351 = vld [vmem:[%s281 + $0x8] sm:$0xff]
        %v352 = vld [vmem:[%s281 + $0x10] sm:$0xff]
        %v353 = vld [vmem:[%s281 + $0x18] sm:$0xff]
        %v354 = vld [vmem:[%s281 + $0x20] sm:$0xff]
        %v355 = vld [vmem:[%s281 + $0x28] sm:$0xff]
        %v356 = vld [vmem:[%s281 + $0x30] sm:$0xff]
        %v357 = vld [vmem:[%s281 + $0x38] sm:$0xff]
        %v358 = vld [vmem:[%s281 + $0x40] sm:$0xff]
        %v359 = vld [vmem:[%s281 + $0x48] sm:$0xff]
        %v360 = vld [vmem:[%s281 + $0x50] sm:$0xff]
        %v361 = vld [vmem:[%s281 + $0x58] sm:$0xff]
        %v362 = vld [vmem:[%s281 + $0x60] sm:$0xff]
        %v363 = vld [vmem:[%s281 + $0x68] sm:$0xff]
        %v364 = vld [vmem:[%s281 + $0x70] sm:$0xff]
        %v365 = vld [vmem:[%s281 + $0x78] sm:$0xff]
        %v366 = vld [vmem:[%s290] sm:$0xff]
        %v367 = vld [vmem:[%s290 + $0x8] sm:$0xff]
        %v368 = vld [vmem:[%s290 + $0x10] sm:$0xff]
        %v369 = vld [vmem:[%s290 + $0x18] sm:$0xff]
        %v370 = vld [vmem:[%s290 + $0x20] sm:$0xff]
        %v371 = vld [vmem:[%s290 + $0x28] sm:$0xff]
        %v372 = vld [vmem:[%s290 + $0x30] sm:$0xff]
        %v373 = vld [vmem:[%s290 + $0x38] sm:$0xff]
        %v374 = vld [vmem:[%s290 + $0x40] sm:$0xff]
        %v375 = vld [vmem:[%s290 + $0x48] sm:$0xff]
        %v376 = vld [vmem:[%s290 + $0x50] sm:$0xff]
        %v377 = vld [vmem:[%s290 + $0x58] sm:$0xff]
        %v378 = vld [vmem:[%s290 + $0x60] sm:$0xff]
        %v379 = vld [vmem:[%s290 + $0x68] sm:$0xff]
        %v380 = vld [vmem:[%s290 + $0x70] sm:$0xff]
        %v381 = vld [vmem:[%s290 + $0x78] sm:$0xff]
        %v382 = vld [vmem:[#allocation7] sm:$0xff]
        %v383 = vld [vmem:[#allocation7 + $0x8] sm:$0xff]
        %v384 = vld [vmem:[#allocation7 + $0x10] sm:$0xff]
        %v385 = vld [vmem:[#allocation7 + $0x18] sm:$0xff]
        %v386 = vld [vmem:[#allocation7 + $0x20] sm:$0xff]
        %v387 = vld [vmem:[#allocation7 + $0x28] sm:$0xff]
        %v388 = vld [vmem:[#allocation7 + $0x30] sm:$0xff]
        %v389 = vld [vmem:[#allocation7 + $0x38] sm:$0xff]
        %v390 = vld [vmem:[#allocation7 + $0x40] sm:$0xff]
        %v391 = vld [vmem:[#allocation7 + $0x48] sm:$0xff]
        %v392 = vld [vmem:[#allocation7 + $0x50] sm:$0xff]
        %v393 = vld [vmem:[#allocation7 + $0x58] sm:$0xff]
        %v394 = vld [vmem:[#allocation7 + $0x60] sm:$0xff]
        %v395 = vld [vmem:[#allocation7 + $0x68] sm:$0xff]
        %v396 = vld [vmem:[#allocation7 + $0x70] sm:$0xff]
        %v397 = vld [vmem:[#allocation7 + $0x78] sm:$0xff]
        %398 = vmatprep.subr.mxu0 0.0
        %399 = vmatpush1.msra.mxu0 %v350
        %400 = vmatprep.subr.mxu0 0.0
        %401 = vmatpush1.msra.mxu0 %v351
        %402 = vmatprep.subr.mxu0 0.0
        %403 = vmatpush1.msra.mxu0 %v352
        %404 = vmatprep.subr.mxu0 0.0
        %405 = vmatpush1.msra.mxu0 %v353
        %406 = vmatprep.subr.mxu0 0.0
        %407 = vmatpush1.msra.mxu0 %v354
        %408 = vmatprep.subr.mxu0 0.0
        %409 = vmatpush1.msra.mxu0 %v355
        %410 = vmatprep.subr.mxu0 0.0
        %411 = vmatpush1.msra.mxu0 %v356
        %412 = vmatprep.subr.mxu0 0.0
        %413 = vmatpush1.msra.mxu0 %v357
        %414 = vmatprep.subr.mxu0 0.0
        %415 = vmatpush1.msra.mxu0 %v358
        %416 = vmatprep.subr.mxu0 0.0
        %417 = vmatpush1.msra.mxu0 %v359
        %418 = vmatprep.subr.mxu0 0.0
        %419 = vmatpush1.msra.mxu0 %v360
        %420 = vmatprep.subr.mxu0 0.0
        %421 = vmatpush1.msra.mxu0 %v361
        %422 = vmatprep.subr.mxu0 0.0
        %423 = vmatpush1.msra.mxu0 %v362
        %424 = vmatprep.subr.mxu0 0.0
        %425 = vmatpush1.msra.mxu0 %v363
        %426 = vmatprep.subr.mxu0 0.0
        %427 = vmatpush1.msra.mxu0 %v364
        %428 = vmatprep.subr.mxu0 0.0
        %429 = vmatpush1.msra.mxu0 %v365
        %430 = vmatprep.subr.mxu0 0.0
        %431 = vmatpush1.msra.mxu0 0.0
        %432 = vmatprep.subr.mxu0 0.0
        %433 = vmatpush1.msra.mxu0 0.0
        %434 = vmatprep.subr.mxu0 0.0
        %435 = vmatpush1.msra.mxu0 0.0
        %436 = vmatprep.subr.mxu0 0.0
        %437 = vmatpush1.msra.mxu0 0.0
        %438 = vmatprep.subr.mxu0 0.0
        %439 = vmatpush1.msra.mxu0 0.0
        %440 = vmatprep.subr.mxu0 0.0
        %441 = vmatpush1.msra.mxu0 0.0
        %442 = vmatprep.subr.mxu0 0.0
        %443 = vmatpush1.msra.mxu0 0.0
        %444 = vmatprep.subr.mxu0 0.0
        %445 = vmatpush1.msra.mxu0 0.0
        %446 = vmatprep.subr.mxu0 0.0
        %447 = vmatpush1.msra.mxu0 0.0
        %448 = vmatprep.subr.mxu0 0.0
        %449 = vmatpush1.msra.mxu0 0.0
        %450 = vmatprep.subr.mxu0 0.0
        %451 = vmatpush1.msra.mxu0 0.0
        %452 = vmatprep.subr.mxu0 0.0
        %453 = vmatpush1.msra.mxu0 0.0
        %454 = vmatprep.subr.mxu0 0.0
        %455 = vmatpush1.msra.mxu0 0.0
        %456 = vmatprep.subr.mxu0 0.0
        %457 = vmatpush1.msra.mxu0 0.0
        %458 = vmatprep.subr.mxu0 0.0
        %459 = vmatpush1.msra.mxu0 0.0
        %460 = vmatprep.subr.mxu0 0.0
        %461 = vmatpush1.msra.mxu0 0.0
        %462 = vmatprep.mubr.f32.mxu0 0.0
        %463 = vmatmul.mubr.f32.gmra.mrb[0].mxu0 %v366
        %v464 = vpop.f32.mrb[0].mxu0
        %v465 = vadd.f32 0.0, %v464
        %v466 = vpop.f32.mrb[0].mxu0
        %467 = vmatprep.mubr.f32.mxu0 0.0
        %468 = vmatmul.mubr.f32.gmra.mrb[0].mxu0 %v367
        %v469 = vpop.f32.mrb[0].mxu0
        %v470 = vadd.f32 0.0, %v469
        %v471 = vpop.f32.mrb[0].mxu0
        %472 = vmatprep.mubr.f32.mxu0 0.0
        %473 = vmatmul.mubr.f32.gmra.mrb[0].mxu0 %v368
        %v474 = vpop.f32.mrb[0].mxu0
        %v475 = vadd.f32 0.0, %v474
        %v476 = vpop.f32.mrb[0].mxu0
        %477 = vmatprep.mubr.f32.mxu0 0.0
        %478 = vmatmul.mubr.f32.gmra.mrb[0].mxu0 %v369
        %v479 = vpop.f32.mrb[0].mxu0
        %v480 = vadd.f32 0.0, %v479
        %v481 = vpop.f32.mrb[0].mxu0
        %482 = vmatprep.mubr.f32.mxu0 0.0
        %483 = vmatmul.mubr.f32.gmra.mrb[0].mxu0 %v370
        %v484 = vpop.f32.mrb[0].mxu0
        %v485 = vadd.f32 0.0, %v484
        %v486 = vpop.f32.mrb[0].mxu0
        %487 = vmatprep.mubr.f32.mxu0 0.0
        %488 = vmatmul.mubr.f32.gmra.mrb[0].mxu0 %v371
        %v489 = vpop.f32.mrb[0].mxu0
        %v490 = vadd.f32 0.0, %v489
        %v491 = vpop.f32.mrb[0].mxu0
        %492 = vmatprep.mubr.f32.mxu0 0.0
        %493 = vmatmul.mubr.f32.gmra.mrb[0].mxu0 %v372
        %v494 = vpop.f32.mrb[0].mxu0
        %v495 = vadd.f32 0.0, %v494
        %v496 = vpop.f32.mrb[0].mxu0
        %497 = vmatprep.mubr.f32.mxu0 0.0
        %498 = vmatmul.mubr.f32.gmra.mrb[0].mxu0 %v373
        %v499 = vpop.f32.mrb[0].mxu0
        %v500 = vadd.f32 0.0, %v499
        %v501 = vpop.f32.mrb[0].mxu0
        %502 = vmatprep.mubr.f32.mxu0 0.0
        %503 = vmatmul.mubr.f32.gmra.mrb[0].mxu0 %v374
        %v504 = vpop.f32.mrb[0].mxu0
        %v505 = vadd.f32 0.0, %v504
        %v506 = vpop.f32.mrb[0].mxu0
        %507 = vmatprep.mubr.f32.mxu0 0.0
        %508 = vmatmul.mubr.f32.gmra.mrb[0].mxu0 %v375
        %v509 = vpop.f32.mrb[0].mxu0
        %v510 = vadd.f32 0.0, %v509
        %v511 = vpop.f32.mrb[0].mxu0
        %512 = vmatprep.mubr.f32.mxu0 0.0
        %513 = vmatmul.mubr.f32.gmra.mrb[0].mxu0 %v376
        %v514 = vpop.f32.mrb[0].mxu0
        %v515 = vadd.f32 0.0, %v514
        %v516 = vpop.f32.mrb[0].mxu0
        %517 = vmatprep.mubr.f32.mxu0 0.0
        %518 = vmatmul.mubr.f32.gmra.mrb[0].mxu0 %v377
        %v519 = vpop.f32.mrb[0].mxu0
        %v520 = vadd.f32 0.0, %v519
        %v521 = vpop.f32.mrb[0].mxu0
        %522 = vmatprep.mubr.f32.mxu0 0.0
        %523 = vmatmul.mubr.f32.gmra.mrb[0].mxu0 %v378
        %v524 = vpop.f32.mrb[0].mxu0
        %v525 = vadd.f32 0.0, %v524
        %v526 = vpop.f32.mrb[0].mxu0
        %527 = vmatprep.mubr.f32.mxu0 0.0
        %528 = vmatmul.mubr.f32.gmra.mrb[0].mxu0 %v379
        %v529 = vpop.f32.mrb[0].mxu0
        %v530 = vadd.f32 0.0, %v529
        %v531 = vpop.f32.mrb[0].mxu0
        %532 = vmatprep.mubr.f32.mxu0 0.0
        %533 = vmatmul.mubr.f32.gmra.mrb[0].mxu0 %v380
        %v534 = vpop.f32.mrb[0].mxu0
        %v535 = vadd.f32 0.0, %v534
        %v536 = vpop.f32.mrb[0].mxu0
        %537 = vmatprep.mubr.f32.mxu0 0.0
        %538 = vmatmul.mubr.f32.gmra.mrb[0].mxu0 %v381
        %v539 = vpop.f32.mrb[0].mxu0
        %v540 = vadd.f32 0.0, %v539
        %v541 = vpop.f32.mrb[0].mxu0
        %542 = vdwg.mxu0
        %v543 = vld [vmem:[#allocation8] sm:$0xff]
        %v544 = vld [vmem:[#allocation8 + $0x8] sm:$0xff]
        %v545 = vld [vmem:[#allocation8 + $0x10] sm:$0xff]
        %v546 = vld [vmem:[#allocation8 + $0x18] sm:$0xff]
        %v547 = vld [vmem:[#allocation8 + $0x20] sm:$0xff]
        %v548 = vld [vmem:[#allocation8 + $0x28] sm:$0xff]
        %v549 = vld [vmem:[#allocation8 + $0x30] sm:$0xff]
        %v550 = vld [vmem:[#allocation8 + $0x38] sm:$0xff]
        %v551 = vld [vmem:[#allocation8 + $0x40] sm:$0xff]
        %v552 = vld [vmem:[#allocation8 + $0x48] sm:$0xff]
        %v553 = vld [vmem:[#allocation8 + $0x50] sm:$0xff]
        %v554 = vld [vmem:[#allocation8 + $0x58] sm:$0xff]
        %v555 = vld [vmem:[#allocation8 + $0x60] sm:$0xff]
        %v556 = vld [vmem:[#allocation8 + $0x68] sm:$0xff]
        %v557 = vld [vmem:[#allocation8 + $0x70] sm:$0xff]
        %v558 = vld [vmem:[#allocation8 + $0x78] sm:$0xff]
        %559 = vmatprep.subr.mxu0 0.0
        %560 = vmatpush1.msra.mxu0 %v543
        %561 = vmatprep.subr.mxu0 0.0
        %562 = vmatpush1.msra.mxu0 %v544
        %563 = vmatprep.subr.mxu0 0.0
        %564 = vmatpush1.msra.mxu0 %v545
        %565 = vmatprep.subr.mxu0 0.0
        %566 = vmatpush1.msra.mxu0 %v546
        %567 = vmatprep.subr.mxu0 0.0
        %568 = vmatpush1.msra.mxu0 %v547
        %569 = vmatprep.subr.mxu0 0.0
        %570 = vmatpush1.msra.mxu0 %v548
        %571 = vmatprep.subr.mxu0 0.0
        %572 = vmatpush1.msra.mxu0 %v549
        %573 = vmatprep.subr.mxu0 0.0
        %574 = vmatpush1.msra.mxu0 %v550
        %575 = vmatprep.subr.mxu0 0.0
        %576 = vmatpush1.msra.mxu0 %v551
        %577 = vmatprep.subr.mxu0 0.0
        %578 = vmatpush1.msra.mxu0 %v552
        %579 = vmatprep.subr.mxu0 0.0
        %580 = vmatpush1.msra.mxu0 %v553
        %581 = vmatprep.subr.mxu0 0.0
        %582 = vmatpush1.msra.mxu0 %v554
        %583 = vmatprep.subr.mxu0 0.0
        %584 = vmatpush1.msra.mxu0 %v555
        %585 = vmatprep.subr.mxu0 0.0
        %586 = vmatpush1.msra.mxu0 %v556
        %587 = vmatprep.subr.mxu0 0.0
        %588 = vmatpush1.msra.mxu0 %v557
        %589 = vmatprep.subr.mxu0 0.0
        %590 = vmatpush1.msra.mxu0 %v558
        %591 = vmatprep.subr.mxu0 0.0
        %592 = vmatpush1.msra.mxu0 0.0
        %593 = vmatprep.subr.mxu0 0.0
        %594 = vmatpush1.msra.mxu0 0.0
        %595 = vmatprep.subr.mxu0 0.0
        %596 = vmatpush1.msra.mxu0 0.0
        %597 = vmatprep.subr.mxu0 0.0
        %598 = vmatpush1.msra.mxu0 0.0
        %599 = vmatprep.subr.mxu0 0.0
        %600 = vmatpush1.msra.mxu0 0.0
        %601 = vmatprep.subr.mxu0 0.0
        %602 = vmatpush1.msra.mxu0 0.0
        %603 = vmatprep.subr.mxu0 0.0
        %604 = vmatpush1.msra.mxu0 0.0
        %605 = vmatprep.subr.mxu0 0.0
        %606 = vmatpush1.msra.mxu0 0.0
        %607 = vmatprep.subr.mxu0 0.0
        %608 = vmatpush1.msra.mxu0 0.0
        %609 = vmatprep.subr.mxu0 0.0
        %610 = vmatpush1.msra.mxu0 0.0
        %611 = vmatprep.subr.mxu0 0.0
        %612 = vmatpush1.msra.mxu0 0.0
        %613 = vmatprep.subr.mxu0 0.0
        %614 = vmatpush1.msra.mxu0 0.0
        %615 = vmatprep.subr.mxu0 0.0
        %616 = vmatpush1.msra.mxu0 0.0
        %617 = vmatprep.subr.mxu0 0.0
        %618 = vmatpush1.msra.mxu0 0.0
        %619 = vmatprep.subr.mxu0 0.0
        %620 = vmatpush1.msra.mxu0 0.0
        %621 = vmatprep.subr.mxu0 0.0
        %622 = vmatpush1.msra.mxu0 0.0
        %623 = vmatprep.mubr.f32.mxu0 0.0
        %624 = vmatmul.mubr.f32.gmra.mrb[0].mxu0 %v465
        %v625 = vpop.f32.mrb[0].mxu0
        %v626 = vadd.f32 0.0, %v625
        %v627 = vpop.f32.mrb[0].mxu0
        %628 = vmatprep.mubr.f32.mxu0 0.0
        %629 = vmatmul.mubr.f32.gmra.mrb[0].mxu0 %v470
        %v630 = vpop.f32.mrb[0].mxu0
        %v631 = vadd.f32 0.0, %v630
        %v632 = vpop.f32.mrb[0].mxu0
        %633 = vmatprep.mubr.f32.mxu0 0.0
        %634 = vmatmul.mubr.f32.gmra.mrb[0].mxu0 %v475
        %v635 = vpop.f32.mrb[0].mxu0
        %v636 = vadd.f32 0.0, %v635
        %v637 = vpop.f32.mrb[0].mxu0
        %638 = vmatprep.mubr.f32.mxu0 0.0
        %639 = vmatmul.mubr.f32.gmra.mrb[0].mxu0 %v480
        %v640 = vpop.f32.mrb[0].mxu0
        %v641 = vadd.f32 0.0, %v640
        %v642 = vpop.f32.mrb[0].mxu0
        %643 = vmatprep.mubr.f32.mxu0 0.0
        %644 = vmatmul.mubr.f32.gmra.mrb[0].mxu0 %v485
        %v645 = vpop.f32.mrb[0].mxu0
        %v646 = vadd.f32 0.0, %v645
        %v647 = vpop.f32.mrb[0].mxu0
        %648 = vmatprep.mubr.f32.mxu0 0.0
        %649 = vmatmul.mubr.f32.gmra.mrb[0].mxu0 %v490
        %v650 = vpop.f32.mrb[0].mxu0
        %v651 = vadd.f32 0.0, %v650
        %v652 = vpop.f32.mrb[0].mxu0
        %653 = vmatprep.mubr.f32.mxu0 0.0
        %654 = vmatmul.mubr.f32.gmra.mrb[0].mxu0 %v495
        %v655 = vpop.f32.mrb[0].mxu0
        %v656 = vadd.f32 0.0, %v655
        %v657 = vpop.f32.mrb[0].mxu0
        %658 = vmatprep.mubr.f32.mxu0 0.0
        %659 = vmatmul.mubr.f32.gmra.mrb[0].mxu0 %v500
        %v660 = vpop.f32.mrb[0].mxu0
        %v661 = vadd.f32 0.0, %v660
        %v662 = vpop.f32.mrb[0].mxu0
        %663 = vmatprep.mubr.f32.mxu0 0.0
        %664 = vmatmul.mubr.f32.gmra.mrb[0].mxu0 %v505
        %v665 = vpop.f32.mrb[0].mxu0
        %v666 = vadd.f32 0.0, %v665
        %v667 = vpop.f32.mrb[0].mxu0
        %668 = vmatprep.mubr.f32.mxu0 0.0
        %669 = vmatmul.mubr.f32.gmra.mrb[0].mxu0 %v510
        %v670 = vpop.f32.mrb[0].mxu0
        %v671 = vadd.f32 0.0, %v670
        %v672 = vpop.f32.mrb[0].mxu0
        %673 = vmatprep.mubr.f32.mxu0 0.0
        %674 = vmatmul.mubr.f32.gmra.mrb[0].mxu0 %v515
        %v675 = vpop.f32.mrb[0].mxu0
        %v676 = vadd.f32 0.0, %v675
        %v677 = vpop.f32.mrb[0].mxu0
        %678 = vmatprep.mubr.f32.mxu0 0.0
        %679 = vmatmul.mubr.f32.gmra.mrb[0].mxu0 %v520
        %v680 = vpop.f32.mrb[0].mxu0
        %v681 = vadd.f32 0.0, %v680
        %v682 = vpop.f32.mrb[0].mxu0
        %683 = vmatprep.mubr.f32.mxu0 0.0
        %684 = vmatmul.mubr.f32.gmra.mrb[0].mxu0 %v525
        %v685 = vpop.f32.mrb[0].mxu0
        %v686 = vadd.f32 0.0, %v685
        %v687 = vpop.f32.mrb[0].mxu0
        %688 = vmatprep.mubr.f32.mxu0 0.0
        %689 = vmatmul.mubr.f32.gmra.mrb[0].mxu0 %v530
        %v690 = vpop.f32.mrb[0].mxu0
        %v691 = vadd.f32 0.0, %v690
        %v692 = vpop.f32.mrb[0].mxu0
        %693 = vmatprep.mubr.f32.mxu0 0.0
        %694 = vmatmul.mubr.f32.gmra.mrb[0].mxu0 %v535
        %v695 = vpop.f32.mrb[0].mxu0
        %v696 = vadd.f32 0.0, %v695
        %v697 = vpop.f32.mrb[0].mxu0
        %698 = vmatprep.mubr.f32.mxu0 0.0
        %699 = vmatmul.mubr.f32.gmra.mrb[0].mxu0 %v540
        %v700 = vpop.f32.mrb[0].mxu0
        %v701 = vadd.f32 0.0, %v700
        %v702 = vpop.f32.mrb[0].mxu0
        %703 = vdwg.mxu0
        %704 = vmatprep.subr.mxu0 0.0
        %705 = vmatpush1.msra.mxu0 %v382
        %706 = vmatprep.subr.mxu0 0.0
        %707 = vmatpush1.msra.mxu0 %v383
        %708 = vmatprep.subr.mxu0 0.0
        %709 = vmatpush1.msra.mxu0 %v384
        %710 = vmatprep.subr.mxu0 0.0
        %711 = vmatpush1.msra.mxu0 %v385
        %712 = vmatprep.subr.mxu0 0.0
        %713 = vmatpush1.msra.mxu0 %v386
        %714 = vmatprep.subr.mxu0 0.0
        %715 = vmatpush1.msra.mxu0 %v387
        %716 = vmatprep.subr.mxu0 0.0
        %717 = vmatpush1.msra.mxu0 %v388
        %718 = vmatprep.subr.mxu0 0.0
        %719 = vmatpush1.msra.mxu0 %v389
        %720 = vmatprep.subr.mxu0 0.0
        %721 = vmatpush1.msra.mxu0 %v390
        %722 = vmatprep.subr.mxu0 0.0
        %723 = vmatpush1.msra.mxu0 %v391
        %724 = vmatprep.subr.mxu0 0.0
        %725 = vmatpush1.msra.mxu0 %v392
        %726 = vmatprep.subr.mxu0 0.0
        %727 = vmatpush1.msra.mxu0 %v393
        %728 = vmatprep.subr.mxu0 0.0
        %729 = vmatpush1.msra.mxu0 %v394
        %730 = vmatprep.subr.mxu0 0.0
        %731 = vmatpush1.msra.mxu0 %v395
        %732 = vmatprep.subr.mxu0 0.0
        %733 = vmatpush1.msra.mxu0 %v396
        %734 = vmatprep.subr.mxu0 0.0
        %735 = vmatpush1.msra.mxu0 %v397
        %736 = vmatprep.subr.mxu0 0.0
        %737 = vmatpush1.msra.mxu0 0.0
        %738 = vmatprep.subr.mxu0 0.0
        %739 = vmatpush1.msra.mxu0 0.0
        %740 = vmatprep.subr.mxu0 0.0
        %741 = vmatpush1.msra.mxu0 0.0
        %742 = vmatprep.subr.mxu0 0.0
        %743 = vmatpush1.msra.mxu0 0.0
        %744 = vmatprep.subr.mxu0 0.0
        %745 = vmatpush1.msra.mxu0 0.0
        %746 = vmatprep.subr.mxu0 0.0
        %747 = vmatpush1.msra.mxu0 0.0
        %748 = vmatprep.subr.mxu0 0.0
        %749 = vmatpush1.msra.mxu0 0.0
        %750 = vmatprep.subr.mxu0 0.0
        %751 = vmatpush1.msra.mxu0 0.0
        %752 = vmatprep.subr.mxu0 0.0
        %753 = vmatpush1.msra.mxu0 0.0
        %754 = vmatprep.subr.mxu0 0.0
        %755 = vmatpush1.msra.mxu0 0.0
        %756 = vmatprep.subr.mxu0 0.0
        %757 = vmatpush1.msra.mxu0 0.0
        %758 = vmatprep.subr.mxu0 0.0
        %759 = vmatpush1.msra.mxu0 0.0
        %760 = vmatprep.subr.mxu0 0.0
        %761 = vmatpush1.msra.mxu0 0.0
        %762 = vmatprep.subr.mxu0 0.0
        %763 = vmatpush1.msra.mxu0 0.0
        %764 = vmatprep.subr.mxu0 0.0
        %765 = vmatpush1.msra.mxu0 0.0
        %766 = vmatprep.subr.mxu0 0.0
        %767 = vmatpush1.msra.mxu0 0.0
        %768 = vmatprep.mubr.f32.mxu0 0.0
        %769 = vmatmul.mubr.f32.gmra.mrb[0].mxu0 %v334
        %v770 = vpop.f32.mrb[0].mxu0
        %v771 = vadd.f32 %v626, %v770
        %v772 = vpop.f32.mrb[0].mxu0
        %773 = vmatprep.mubr.f32.mxu0 0.0
        %774 = vmatmul.mubr.f32.gmra.mrb[0].mxu0 %v335
        %v775 = vpop.f32.mrb[0].mxu0
        %v776 = vadd.f32 %v631, %v775
        %v777 = vpop.f32.mrb[0].mxu0
        %778 = vmatprep.mubr.f32.mxu0 0.0
        %779 = vmatmul.mubr.f32.gmra.mrb[0].mxu0 %v336
        %v780 = vpop.f32.mrb[0].mxu0
        %v781 = vadd.f32 %v636, %v780
        %v782 = vpop.f32.mrb[0].mxu0
        %783 = vmatprep.mubr.f32.mxu0 0.0
        %784 = vmatmul.mubr.f32.gmra.mrb[0].mxu0 %v337
        %v785 = vpop.f32.mrb[0].mxu0
        %v786 = vadd.f32 %v641, %v785
        %v787 = vpop.f32.mrb[0].mxu0
        %788 = vmatprep.mubr.f32.mxu0 0.0
        %789 = vmatmul.mubr.f32.gmra.mrb[0].mxu0 %v338
        %v790 = vpop.f32.mrb[0].mxu0
        %v791 = vadd.f32 %v646, %v790
        %v792 = vpop.f32.mrb[0].mxu0
        %793 = vmatprep.mubr.f32.mxu0 0.0
        %794 = vmatmul.mubr.f32.gmra.mrb[0].mxu0 %v339
        %v795 = vpop.f32.mrb[0].mxu0
        %v796 = vadd.f32 %v651, %v795
        %v797 = vpop.f32.mrb[0].mxu0
        %798 = vmatprep.mubr.f32.mxu0 0.0
        %799 = vmatmul.mubr.f32.gmra.mrb[0].mxu0 %v340
        %v800 = vpop.f32.mrb[0].mxu0
        %v801 = vadd.f32 %v656, %v800
        %v802 = vpop.f32.mrb[0].mxu0
        %803 = vmatprep.mubr.f32.mxu0 0.0
        %804 = vmatmul.mubr.f32.gmra.mrb[0].mxu0 %v341
        %v805 = vpop.f32.mrb[0].mxu0
        %v806 = vadd.f32 %v661, %v805
        %v807 = vpop.f32.mrb[0].mxu0
        %808 = vmatprep.mubr.f32.mxu0 0.0
        %809 = vmatmul.mubr.f32.gmra.mrb[0].mxu0 %v342
        %v810 = vpop.f32.mrb[0].mxu0
        %v811 = vadd.f32 %v666, %v810
        %v812 = vpop.f32.mrb[0].mxu0
        %813 = vmatprep.mubr.f32.mxu0 0.0
        %814 = vmatmul.mubr.f32.gmra.mrb[0].mxu0 %v343
        %v815 = vpop.f32.mrb[0].mxu0
        %v816 = vadd.f32 %v671, %v815
        %v817 = vpop.f32.mrb[0].mxu0
        %818 = vmatprep.mubr.f32.mxu0 0.0
        %819 = vmatmul.mubr.f32.gmra.mrb[0].mxu0 %v344
        %v820 = vpop.f32.mrb[0].mxu0
        %v821 = vadd.f32 %v676, %v820
        %v822 = vpop.f32.mrb[0].mxu0
        %823 = vmatprep.mubr.f32.mxu0 0.0
        %824 = vmatmul.mubr.f32.gmra.mrb[0].mxu0 %v345
        %v825 = vpop.f32.mrb[0].mxu0
        %v826 = vadd.f32 %v681, %v825
        %v827 = vpop.f32.mrb[0].mxu0
        %828 = vmatprep.mubr.f32.mxu0 0.0
        %829 = vmatmul.mubr.f32.gmra.mrb[0].mxu0 %v346
        %v830 = vpop.f32.mrb[0].mxu0
        %v831 = vadd.f32 %v686, %v830
        %v832 = vpop.f32.mrb[0].mxu0
        %833 = vmatprep.mubr.f32.mxu0 0.0
        %834 = vmatmul.mubr.f32.gmra.mrb[0].mxu0 %v347
        %v835 = vpop.f32.mrb[0].mxu0
        %v836 = vadd.f32 %v691, %v835
        %v837 = vpop.f32.mrb[0].mxu0
        %838 = vmatprep.mubr.f32.mxu0 0.0
        %839 = vmatmul.mubr.f32.gmra.mrb[0].mxu0 %v348
        %v840 = vpop.f32.mrb[0].mxu0
        %v841 = vadd.f32 %v696, %v840
        %v842 = vpop.f32.mrb[0].mxu0
        %843 = vmatprep.mubr.f32.mxu0 0.0
        %844 = vmatmul.mubr.f32.gmra.mrb[0].mxu0 %v349
        %v845 = vpop.f32.mrb[0].mxu0
        %v846 = vadd.f32 %v701, %v845
        %v847 = vpop.f32.mrb[0].mxu0
        %848 = vdwg.mxu0
        %v849 = vld [vmem:[%s4] sm:$0x1]
        %v851 = vlaneseq
        %v852 = vshrl.u32 %v851, 7
        %v853 = vsub.s32 0, %v852
        %v854 = vrot.slane %v849, %v853
        %v856 = vadd.f32 %v771, %v854
        %v857 = vadd.f32 %v776, %v854
        %v858 = vadd.f32 %v781, %v854
        %v859 = vadd.f32 %v786, %v854
        %v860 = vadd.f32 %v791, %v854
        %v861 = vadd.f32 %v796, %v854
        %v862 = vadd.f32 %v801, %v854
        %v863 = vadd.f32 %v806, %v854
        %v864 = vadd.f32 %v811, %v854
        %v865 = vadd.f32 %v816, %v854
        %v866 = vadd.f32 %v821, %v854
        %v867 = vadd.f32 %v826, %v854
        %v868 = vadd.f32 %v831, %v854
        %v869 = vadd.f32 %v836, %v854
        %v870 = vadd.f32 %v841, %v854
        %v871 = vadd.f32 %v846, %v854
        %v872 = vmax.f32 %v856, 0.0
        %v873 = vmax.f32 %v857, 0.0
        %v874 = vmax.f32 %v858, 0.0
        %v875 = vmax.f32 %v859, 0.0
        %v876 = vmax.f32 %v860, 0.0
        %v877 = vmax.f32 %v861, 0.0
        %v878 = vmax.f32 %v862, 0.0
        %v879 = vmax.f32 %v863, 0.0
        %v880 = vmax.f32 %v864, 0.0
        %v881 = vmax.f32 %v865, 0.0
        %v882 = vmax.f32 %v866, 0.0
        %v883 = vmax.f32 %v867, 0.0
        %v884 = vmax.f32 %v868, 0.0
        %v885 = vmax.f32 %v869, 0.0
        %v886 = vmax.f32 %v870, 0.0
        %v887 = vmax.f32 %v871, 0.0
        %888 = vst [vmem:[%s329] sm:$0xff] %v872
        %889 = vst [vmem:[%s329 + $0x8] sm:$0xff] %v873
        %890 = vst [vmem:[%s329 + $0x10] sm:$0xff] %v874
        %891 = vst [vmem:[%s329 + $0x18] sm:$0xff] %v875
        %892 = vst [vmem:[%s329 + $0x20] sm:$0xff] %v876
        %893 = vst [vmem:[%s329 + $0x28] sm:$0xff] %v877
        %894 = vst [vmem:[%s329 + $0x30] sm:$0xff] %v878
        %895 = vst [vmem:[%s329 + $0x38] sm:$0xff] %v879
        %896 = vst [vmem:[%s329 + $0x40] sm:$0xff] %v880
        %897 = vst [vmem:[%s329 + $0x48] sm:$0xff] %v881
        %898 = vst [vmem:[%s329 + $0x50] sm:$0xff] %v882
        %899 = vst [vmem:[%s329 + $0x58] sm:$0xff] %v883
        %900 = vst [vmem:[%s329 + $0x60] sm:$0xff] %v884
        %901 = vst [vmem:[%s329 + $0x68] sm:$0xff] %v885
        %902 = vst [vmem:[%s329 + $0x70] sm:$0xff] %v886
        %903 = vst [vmem:[%s329 + $0x78] sm:$0xff] %v887
        %s904 = sand.u32 %s165, 1
        %s905 = scalar_lea.sflag [#allocation4], %s904
        %s906 = sand.u32 %s165, 1
        %s907 = smul.addr %s906, 128
        %s908 = scalar_lea.vmem [#allocation10], %s907
        // Predicated region
        $region57: #{tpu_custom_call.1} parent=39 // pred_check
          %p909 = pneg %p175
        $region58: #{tpu_custom_call.1} parent=39 // pred_check_branch
          %911 = sbr.rel (%p909) target = $region60
        $region59: #{tpu_custom_call.1} parent=39 // pred_region
          %s912 = smul.u32 16, %s31
          %s914 = ssub.s32 2048, 2048
          %915 = vsyncadd %s905, %s914
          %s916 = smul.addr %s30, 16
          %s917 = sadd.s32 %s912, %s916
          %s918 = smul.addr %s917, 128
          %s919 = scalar_lea.hbm %s5, %s918
          %s920 = sshll.u32 %s908, 4
          %s921 = int_to_ptr.vmem [resolvable:$true] %s920
          %926 = dma.vmem_to_hbm [thread:$0]  %s921, 2048, %s919, %s905, 128, 128, 8
        $region60: #{tpu_custom_call.1} parent=39 // pred_fallthru
          _
      $region40: #{tpu_custom_call.1} parent=5 // pred_fallthru
        _
      %p927 = scmp.le.s32.totalorder 2, %s21
      // Predicated region
      $region61: #{tpu_custom_call.1} parent=5 // pred_check
        %p928 = pneg %p927
      $region62: #{tpu_custom_call.1} parent=5 // pred_check_branch
        %930 = sbr.rel (%p928) target = $region64
      $region63: #{tpu_custom_call.1} parent=5 // pred_region
        %s931 = ssub.s32 %s21, 2
        // Predicated region
        $region65: #{tpu_custom_call.1} parent=63 // pred_check
          %p932 = pneg %p181
        $region66: #{tpu_custom_call.1} parent=63 // pred_check_branch
          %934 = sbr.rel (%p932) target = $region68
        $region67: #{tpu_custom_call.1} parent=63 // pred_region
          %s935 = sand.u32 %s166, 1
          %s936 = scalar_lea.sflag [#allocation4], %s935
          %s937 = sand.u32 %s166, 1
          %s938 = smul.addr %s937, 128
          %s939 = scalar_lea.vmem [#allocation10], %s938
          %940 = dma.done %s936, 2048
        $region68: #{tpu_custom_call.1} parent=63 // pred_fallthru
          _
      $region64: #{tpu_custom_call.1} parent=5 // pred_fallthru
        _
    $region6: #{tpu_custom_call.1} parent=1 // loop_footer
      %s25 = sadd.s32 1, %s21
    $region7: #{tpu_custom_call.1} parent=1 // loop_footer_branch
      %20 = sbr.rel target = $region3
    $region8: #{tpu_custom_call.1} parent=1 // loop_exit
      _
    %941 = vsyncpa [#allocation3], 1
    %s942 = scalar_lea.sflag [#allocation3], 1
    %943 = vsyncpa %s942, 1
    %944 = vsyncpa [#allocation6], 1
    %s945 = scalar_lea.sflag [#allocation6], 1
    %946 = vsyncpa %s945, 1
    %947 = vsyncpa [#allocation9], 1
    %948 = vsyncpa [#allocation4], 1
    %s949 = scalar_lea.sflag [#allocation4], 1
    %950 = vsyncpa %s949, 1

</llo_original>
